<compile_context>
chip_gen: v6e
topology: v6e:2x2x1
jax: 0.10.0
libtpu: 0.0.40
codegen_flags: <defaults>
</compile_context>

<pallas_src>
import functools

import jax
import jax.numpy as jnp
from jax.experimental import pallas as pl
from jax.experimental.pallas import tpu as pltpu


# ---------------------------------------------------------------------------
# Layout / budgeting constants
# ---------------------------------------------------------------------------
_LANE_QUANTUM = 384                    # lcm(3, 128): lane-dense, fixed xyz phase
_LANE_MAX = 3072                       # preferred lane width (multiple of 384)
_FUSED_MAX_ELEMS = 256 * 1024          # <= 1 MiB f32 per-batch slab -> fused path
_TARGET_BLOCK_ELEMS = 384 * 1024       # ~1.5 MiB f32 per pipelined buffer (tiled)
_VMEM_LIMIT_BYTES = 32 * 1024 * 1024   # safe on v5e/v6e (128 MiB) and v7x (64 MiB)


def _choose_layout(m):
    """Pick (lane width C, rows R, padded length Mp) for a per-batch row of length m."""
    if m <= _LANE_MAX:
        return m, 1, m                              # whole row in one lane row
    # Prefer a lane-dense divisor (multiple of 384 = lcm(3, 128)).
    c = (_LANE_MAX // _LANE_QUANTUM) * _LANE_QUANTUM
    while c >= _LANE_QUANTUM:
        if m % c == 0:
            return c, m // c, m
        c -= _LANE_QUANTUM
    # Fall back: any reasonably wide multiple-of-3 divisor (keeps xyz phase per lane).
    c = _LANE_MAX - (_LANE_MAX % 3)
    while c >= 768:
        if m % c == 0:
            return c, m // c, m
        c -= 3
    # Last resort: zero-pad the row to a multiple of _LANE_MAX (extra copy, rare).
    mp = ((m + _LANE_MAX - 1) // _LANE_MAX) * _LANE_MAX
    return _LANE_MAX, mp // _LANE_MAX, mp


# ---------------------------------------------------------------------------
# Kernels
# ---------------------------------------------------------------------------
def _fused_kernel(n_points, bc_ref, x_ref, o_ref):
    """Single pass per batch: in-kernel component mean + shifted write.

    bc_ref: (3,) f32 in SMEM.  x_ref / o_ref: (1, R, C) blocks, C % 3 == 0
    (or R == 1), so the xyz component of a lane is lane_index % 3.
    Zero padding (if any) contributes nothing to the sums; n_points is the
    true point count.
    """
    x = x_ref[...]
    xf = x.astype(jnp.float32)
    c = x.shape[-1]
    lane = jax.lax.broadcasted_iota(jnp.int32, (1, 1, c), 2) % 3

    # Fold rows first (cheap XLU reduction), then split by xyz lane phase.
    col_sum = jnp.sum(xf, axis=1, keepdims=True)                      # (1, 1, C)
    inv_n = jnp.float32(1.0 / n_points)
    m0 = jnp.sum(jnp.where(lane == 0, col_sum, 0.0), keepdims=True) * inv_n
    m1 = jnp.sum(jnp.where(lane == 1, col_sum, 0.0), keepdims=True) * inv_n
    m2 = jnp.sum(jnp.where(lane == 2, col_sum, 0.0), keepdims=True) * inv_n

    sh0 = bc_ref[0] - m0
    sh1 = bc_ref[1] - m1
    sh2 = bc_ref[2] - m2
    shift_row = jnp.where(lane == 0, sh0, jnp.where(lane == 1, sh1, sh2))  # (1,1,C)

    o_ref[...] = (xf + shift_row).astype(o_ref.dtype)


def _tiled_kernel(tiles_per_batch, shift_ref, x_ref, o_ref):
    """Streaming add of a per-batch xyz shift.

    shift_ref: (B*3,) f32 in SMEM (barycenter - mean, precomputed).
    x_ref / o_ref: (1, TR, C) blocks, C % 3 == 0.
    """
    b = pl.program_id(0) // tiles_per_batch
    x = x_ref[...]
    c = x.shape[-1]
    lane = jax.lax.broadcasted_iota(jnp.int32, (1, 1, c), 2) % 3

    sh0 = shift_ref[b * 3 + 0]
    sh1 = shift_ref[b * 3 + 1]
    sh2 = shift_ref[b * 3 + 2]
    shift_row = jnp.where(lane == 0, sh0, jnp.where(lane == 1, sh1, sh2))
    shift_row = shift_row.astype(x.dtype)   # native-dtype add (bf16 on v6e/v7x)

    o_ref[...] = (x + shift_row).astype(o_ref.dtype)


# ---------------------------------------------------------------------------
# Wrapper
# ---------------------------------------------------------------------------
@functools.partial(jax.jit, static_argnames=("donate_x",))
def barycenter_forward(x, barycenter, *, donate_x=False):
    """x: any shape whose per-batch flattened size is divisible by 3.
    barycenter: shape (3,).  Returns (B, N, 3) in x's dtype."""
    orig_dtype = x.dtype
    B = x.shape[0]
    x_flat = x.reshape(B, -1)
    M = x_flat.shape[1]
    if M % 3 != 0:
        raise ValueError("per-batch flattened size must be divisible by 3")
    N = M // 3

    C, R, Mp = _choose_layout(M)
    if Mp != M:
        x_flat = jnp.pad(x_flat, ((0, 0), (0, Mp - M)))  # zeros: sums unaffected
    x_slab = x_flat.reshape(B, R, C)

    bc = barycenter.astype(jnp.float32).reshape(3)
    slab_elems = R * C
    itemsize = jnp.dtype(orig_dtype).itemsize
    io_aliases = {1: 0} if donate_x else {}

    if slab_elems <= _FUSED_MAX_ELEMS:
        # -------- Fused single-pass path: grid over batches --------
        cost = pl.CostEstimate(
            flops=3 * B * slab_elems,
            transcendentals=0,
            bytes_accessed=2 * B * slab_elems * itemsize,
        )
        out = pl.pallas_call(
            functools.partial(_fused_kernel, N),
            out_shape=jax.ShapeDtypeStruct((B, R, C), orig_dtype),
            grid=(B,),
            in_specs=[
                pl.BlockSpec(memory_space=pltpu.MemorySpace.SMEM),   # barycenter (3,)
                pl.BlockSpec((1, R, C), lambda b: (b, 0, 0)),
            ],
            out_specs=pl.BlockSpec((1, R, C), lambda b: (b, 0, 0)),
            compiler_params=pltpu.CompilerParams(
                dimension_semantics=("parallel",),
                vmem_limit_bytes=_VMEM_LIMIT_BYTES,
            ),
            cost_estimate=cost,
            input_output_aliases=io_aliases,
        )(bc, x_slab)
    else:
        # -------- Two-phase path for large rows --------
        # Phase 1 (tiny, XLA): per-batch component mean with f32 accumulation.
        mean = jnp.mean(x.reshape(B, N, 3).astype(jnp.float32), axis=1)   # (B, 3)
        shift = (bc[None, :] - mean).reshape(B * 3)                       # (B*3,) f32

        # Phase 2 (Pallas): streaming shift-add on (1, TR, C) blocks.
        tr = max(8, (_TARGET_BLOCK_ELEMS // C) // 8 * 8)
        if tr >= R:
            tr, tiles = R, 1
        else:
            tiles = pl.cdiv(R, tr)   # ragged last tile -> masked store, still correct
        total_steps = B * tiles

        cost = pl.CostEstimate(
            flops=2 * B * slab_elems,
            transcendentals=0,
            bytes_accessed=(2 * B * slab_elems + B * M) * itemsize,
        )
        out = pl.pallas_call(
            functools.partial(_tiled_kernel, tiles),
            out_shape=jax.ShapeDtypeStruct((B, R, C), orig_dtype),
            grid=(total_steps,),
            in_specs=[
                pl.BlockSpec(memory_space=pltpu.MemorySpace.SMEM),   # shift (B*3,)
                pl.BlockSpec((1, tr, C), lambda i: (i // tiles, i % tiles, 0)),
            ],
            out_specs=pl.BlockSpec((1, tr, C), lambda i: (i // tiles, i % tiles, 0)),
            compiler_params=pltpu.CompilerParams(
                dimension_semantics=("parallel",),
                vmem_limit_bytes=_VMEM_LIMIT_BYTES,
            ),
            cost_estimate=cost,
            input_output_aliases=io_aliases,
        )(shift, x_slab)

    out_flat = out.reshape(B, R * C)
    if Mp != M:
        out_flat = out_flat[:, :M]
    return out_flat.reshape(B, N, 3)


# ---------------------------------------------------------------------------
# Reference + demo
# ---------------------------------------------------------------------------
def _reference(x, barycenter):
    B = x.shape[0]
    x3 = x.reshape(B, -1, 3)
    return x3 - jnp.mean(x3, axis=1, keepdims=True) + barycenter[None, None, :]


if __name__ == "__main__":
    key = jax.random.PRNGKey(0)
    k1, k2 = jax.random.split(key)
    bary = jnp.array([0.1, -0.2, 0.3], dtype=jnp.float32)

    # Case 1: image-like input, B=2, per-batch flattened size 768 -> N=256 points.
    x1 = jax.random.normal(k1, (2, 3, 16, 16), dtype=jnp.float32)
    out1 = jax.block_until_ready(barycenter_forward(x1, bary))
    ref1 = _reference(x1, bary)
    assert out1.shape == ref1.shape == (2, 256, 3)
    assert jnp.allclose(out1, ref1, atol=1e-5, rtol=1e-5)

    # Case 2: raw point cloud with an awkward N (exercises the M <= 3072 layout).
    x2 = jax.random.normal(k2, (2, 250, 3), dtype=jnp.float32)
    out2 = jax.block_until_ready(barycenter_forward(x2, bary))
    ref2 = _reference(x2, bary)
    assert out2.shape == ref2.shape == (2, 250, 3)
    assert jnp.allclose(out2, ref2, atol=1e-5, rtol=1e-5)

    print("KERNEL_OK")
</pallas_src>

<mosaic_0001>
module attributes {stable_mosaic.version = 11 : i64} {
  func.func @_fused_kernel(%arg0: i32, %arg1: memref<3xf32, #tpu.memory_space<smem>>, %arg2: memref<1x1x768xf32, #tpu.memory_space<vmem>>, %arg3: memref<1x1x768xf32, #tpu.memory_space<vmem>>) attributes {dimension_semantics = [#tpu.dimension_semantics<parallel>], iteration_bounds = array<i64: 2>, scalar_prefetch = 0 : i64, scratch_operands = 0 : i64, tpu.core_type = #tpu.core_type<tc>, window_params = [{transform_indices = @transform_0, window_bounds = array<i64: 3>}, {transform_indices = @transform_1, window_bounds = array<i64: 1, 1, 768>}, {transform_indices = @transform_2, window_bounds = array<i64: 1, 1, 768>}]} {
    %c0 = arith.constant 0 : index
    %c0_0 = arith.constant 0 : index
    %c0_1 = arith.constant 0 : index
    %0 = vector.load %arg2[%c0, %c0_0, %c0_1] : memref<1x1x768xf32, #tpu.memory_space<vmem>>, vector<1x1x768xf32>
    %1 = tpu.iota {dimensions = array<i32: 2>} : vector<1x1x768xi32>
    %c3_i32 = arith.constant 3 : i32
    %c0_i32 = arith.constant 0 : i32
    %2 = arith.cmpi eq, %c3_i32, %c0_i32 : i32
    %c1_i32 = arith.constant 1 : i32
    %3 = arith.select %2, %c1_i32, %c3_i32 : i32
    %4 = vector.broadcast %3 : i32 to vector<1x1x768xi32>
    %5 = arith.remsi %1, %4 : vector<1x1x768xi32>
    %c0_i32_2 = arith.constant 0 : i32
    %6 = vector.broadcast %c0_i32_2 : i32 to vector<1x1x768xi32>
    %7 = arith.cmpi ne, %5, %6 : vector<1x1x768xi32>
    %c0_i32_3 = arith.constant 0 : i32
    %8 = vector.broadcast %c0_i32_3 : i32 to vector<1x1x768xi32>
    %9 = arith.cmpi slt, %5, %8 : vector<1x1x768xi32>
    %c0_i32_4 = arith.constant 0 : i32
    %10 = arith.cmpi slt, %3, %c0_i32_4 : i32
    %11 = vector.broadcast %10 : i1 to vector<1x1x768xi1>
    %12 = vector.broadcast %11 : vector<1x1x768xi1> to vector<1x1x768xi1>
    %13 = arith.xori %9, %12 : vector<1x1x768xi1>
    %14 = arith.andi %13, %7 : vector<1x1x768xi1>
    %15 = vector.broadcast %3 : i32 to vector<1x1x768xi32>
    %16 = arith.addi %5, %15 : vector<1x1x768xi32>
    %17 = arith.select %14, %16, %5 : vector<1x1x768xi1>, vector<1x1x768xi32>
    %cst = arith.constant dense<0.000000e+00> : vector<1x768xf32>
    %18 = vector.multi_reduction <add>, %0, %cst [1] : vector<1x1x768xf32> to vector<1x768xf32>
    %19 = vector.shape_cast %18 : vector<1x768xf32> to vector<1x1x768xf32>
    %c0_i32_5 = arith.constant 0 : i32
    %20 = vector.broadcast %c0_i32_5 : i32 to vector<1x1x768xi32>
    %21 = arith.cmpi eq, %17, %20 : vector<1x1x768xi32>
    %cst_6 = arith.constant 0.000000e+00 : f32
    %22 = vector.broadcast %cst_6 : f32 to vector<1x1x768xf32>
    %23 = arith.select %21, %19, %22 : vector<1x1x768xi1>, vector<1x1x768xf32>
    %24 = vector.shape_cast %23 : vector<1x1x768xf32> to vector<1x1x1x768xf32>
    %cst_7 = arith.constant dense<0.000000e+00> : vector<1xf32>
    %25 = vector.multi_reduction <add>, %24, %cst_7 [1, 2, 3] : vector<1x1x1x768xf32> to vector<1xf32>
    %26 = vector.shape_cast %25 : vector<1xf32> to vector<1x1x1x1xf32>
    %27 = vector.extract %26[0, 0, 0, 0] : f32 from vector<1x1x1x1xf32>
    %28 = vector.broadcast %27 : f32 to vector<1x1x1xf32>
    %cst_8 = arith.constant 3.906250e-03 : f32
    %29 = vector.broadcast %cst_8 : f32 to vector<1x1x1xf32>
    %30 = arith.mulf %28, %29 : vector<1x1x1xf32>
    %c1_i32_9 = arith.constant 1 : i32
    %31 = vector.broadcast %c1_i32_9 : i32 to vector<1x1x768xi32>
    %32 = arith.cmpi eq, %17, %31 : vector<1x1x768xi32>
    %cst_10 = arith.constant 0.000000e+00 : f32
    %33 = vector.broadcast %cst_10 : f32 to vector<1x1x768xf32>
    %34 = arith.select %32, %19, %33 : vector<1x1x768xi1>, vector<1x1x768xf32>
    %35 = vector.shape_cast %34 : vector<1x1x768xf32> to vector<1x1x1x768xf32>
    %cst_11 = arith.constant dense<0.000000e+00> : vector<1xf32>
    %36 = vector.multi_reduction <add>, %35, %cst_11 [1, 2, 3] : vector<1x1x1x768xf32> to vector<1xf32>
    %37 = vector.shape_cast %36 : vector<1xf32> to vector<1x1x1x1xf32>
    %38 = vector.extract %37[0, 0, 0, 0] : f32 from vector<1x1x1x1xf32>
    %39 = vector.broadcast %38 : f32 to vector<1x1x1xf32>
    %cst_12 = arith.constant 3.906250e-03 : f32
    %40 = vector.broadcast %cst_12 : f32 to vector<1x1x1xf32>
    %41 = arith.mulf %39, %40 : vector<1x1x1xf32>
    %c2_i32 = arith.constant 2 : i32
    %42 = vector.broadcast %c2_i32 : i32 to vector<1x1x768xi32>
    %43 = arith.cmpi eq, %17, %42 : vector<1x1x768xi32>
    %cst_13 = arith.constant 0.000000e+00 : f32
    %44 = vector.broadcast %cst_13 : f32 to vector<1x1x768xf32>
    %45 = arith.select %43, %19, %44 : vector<1x1x768xi1>, vector<1x1x768xf32>
    %46 = vector.shape_cast %45 : vector<1x1x768xf32> to vector<1x1x1x768xf32>
    %cst_14 = arith.constant dense<0.000000e+00> : vector<1xf32>
    %47 = vector.multi_reduction <add>, %46, %cst_14 [1, 2, 3] : vector<1x1x1x768xf32> to vector<1xf32>
    %48 = vector.shape_cast %47 : vector<1xf32> to vector<1x1x1x1xf32>
    %49 = vector.extract %48[0, 0, 0, 0] : f32 from vector<1x1x1x1xf32>
    %50 = vector.broadcast %49 : f32 to vector<1x1x1xf32>
    %cst_15 = arith.constant 3.906250e-03 : f32
    %51 = vector.broadcast %cst_15 : f32 to vector<1x1x1xf32>
    %52 = arith.mulf %50, %51 : vector<1x1x1xf32>
    %c0_16 = arith.constant 0 : index
    %53 = memref.load %arg1[%c0_16] : memref<3xf32, #tpu.memory_space<smem>>
    %54 = vector.broadcast %53 : f32 to vector<1x1x1xf32>
    %55 = arith.subf %54, %30 : vector<1x1x1xf32>
    %c1 = arith.constant 1 : index
    %56 = memref.load %arg1[%c1] : memref<3xf32, #tpu.memory_space<smem>>
    %57 = vector.broadcast %56 : f32 to vector<1x1x1xf32>
    %58 = arith.subf %57, %41 : vector<1x1x1xf32>
    %c2 = arith.constant 2 : index
    %59 = memref.load %arg1[%c2] : memref<3xf32, #tpu.memory_space<smem>>
    %60 = vector.broadcast %59 : f32 to vector<1x1x1xf32>
    %61 = arith.subf %60, %52 : vector<1x1x1xf32>
    %c0_i32_17 = arith.constant 0 : i32
    %62 = vector.broadcast %c0_i32_17 : i32 to vector<1x1x768xi32>
    %63 = arith.cmpi eq, %17, %62 : vector<1x1x768xi32>
    %c1_i32_18 = arith.constant 1 : i32
    %64 = vector.broadcast %c1_i32_18 : i32 to vector<1x1x768xi32>
    %65 = arith.cmpi eq, %17, %64 : vector<1x1x768xi32>
    %66 = vector.shape_cast %58 : vector<1x1x1xf32> to vector<1x1x1xf32>
    %67 = vector.broadcast %66 : vector<1x1x1xf32> to vector<1x1x768xf32>
    %68 = vector.shape_cast %61 : vector<1x1x1xf32> to vector<1x1x1xf32>
    %69 = vector.broadcast %68 : vector<1x1x1xf32> to vector<1x1x768xf32>
    %70 = arith.select %65, %67, %69 : vector<1x1x768xi1>, vector<1x1x768xf32>
    %71 = vector.shape_cast %55 : vector<1x1x1xf32> to vector<1x1x1xf32>
    %72 = vector.broadcast %71 : vector<1x1x1xf32> to vector<1x1x768xf32>
    %73 = arith.select %63, %72, %70 : vector<1x1x768xi1>, vector<1x1x768xf32>
    %74 = arith.addf %0, %73 : vector<1x1x768xf32>
    %c0_19 = arith.constant 0 : index
    %c0_20 = arith.constant 0 : index
    %c0_21 = arith.constant 0 : index
    %75 = vector.load %arg3[%c0_19, %c0_20, %c0_21] : memref<1x1x768xf32, #tpu.memory_space<vmem>>, vector<1x1x768xf32>
    tpu.vector_store %arg3[%c0_19, %c0_20, %c0_21], %74 {strides = array<i32>} : memref<1x1x768xf32, #tpu.memory_space<vmem>>, vector<1x1x768xf32>,
    return
  }
  func.func @transform_0(%arg0: i32) -> i32 {
    %c0_i32 = arith.constant 0 : i32
    %c0_i32_0 = arith.constant 0 : i32
    return %c0_i32 : i32
  }
  func.func @transform_1(%arg0: i32) -> (i32, i32, i32) {
    %c0_i32 = arith.constant 0 : i32
    %c0_i32_0 = arith.constant 0 : i32
    %c0_i32_1 = arith.constant 0 : i32
    return %arg0, %c0_i32, %c0_i32_0 : i32, i32, i32
  }
  func.func @transform_2(%arg0: i32) -> (i32, i32, i32) {
    %c0_i32 = arith.constant 0 : i32
    %c0_i32_0 = arith.constant 0 : i32
    %c0_i32_1 = arith.constant 0 : i32
    return %arg0, %c0_i32, %c0_i32_0 : i32, i32, i32
  }
}

</mosaic_0001>

<llo_original>
// kernel: barycenter_forward.1
$region0: #{barycenter_forward.1}
  #allocation0 [shape = 'u32[]', space=smem, size = 0x4, offset = 0x4, fixed_abs, tag = 'smem constant byte address 0x4 - core index']
  #allocation1 [shape = 'u32[144,128]{1,0:T(1,128)}', space=vmem, size = 0x12000, scoped, tag = 'internal scratch']
  %s0 = inlined_call_operand.vmem [shape: f32[3], index: 0, kind: input, shape index: {}]
  %s1 = inlined_call_operand.vmem [shape: f32[2,1,768], index: 1, kind: input, shape index: {}]
  %s2 = inlined_call_operand.vmem [shape: f32[2,1,768], index: 2, kind: output, shape index: {}]
  %s3 = sld [smem:[#allocation0]]
  $region45: #{barycenter_forward.1} parent=0
    _
  %s5 = ssub.s32 1, %s3
  %s6 = scalar_select 0, %s5, %s3
  $region1: #{barycenter_forward.1} parent=0
    #allocation2 [shape = 'u8[512]{0}', space=smem, size = 0x200, scoped, tag = 'input window, operand 0, single buffered']
    #allocation3 [shape = 's32[2]{0}', space=sflag, size = 0x8, scoped, tag = 'scoped memory for barycenter_forward.1']
    %7 = vsyncpa [#allocation3], 0
    loop: start=0, step=1, limit=4
    $region2: #{barycenter_forward.1} parent=1 // loop_pre_header
      _
    $region3: #{barycenter_forward.1} parent=1 // loop_header
      %s9 = sphi 0, %s13
      %p10 = scmp.ge.s32.totalorder %s9, 4
      %s17 = sphi 0, %s17
      %s19 = sphi 0, %s17
      %s20 = sphi 0, %s19
      %s34 = sphi 0, %s20
      %s40 = sphi 0, %s42
      %s43 = sphi 0, %s40
      %s44 = sphi 0, %s43
      %s60 = sphi 0, %s44
      %s66 = sphi 0, %s68
      %s69 = sphi 0, %s66
      %s70 = sphi 0, %s69
      %s86 = sphi 0, %s70
    $region4: #{barycenter_forward.1} parent=1 // loop_header_branch
      %12 = sbr.rel (%p10) target = $region8
    $region5: #{barycenter_forward.1} parent=1 // loop_body
      %s14 = ssub.s32 %s9, 1
      %s15 = ssub.s32 %s9, 2
      %s16 = sadd.s32 %s9, 1
      %s18 = sadd.s32 %s17, 1
      %p21 = scmp.eq.s32.totalorder %s9, 1
      %p22 = scmp.ne.s32.totalorder %s17, %s19
      %p23 = scmp.eq.s32.totalorder %s9, 0
      %p24 = por %p22, %p23
      %p25 = scmp.ne.s32.totalorder %s17, %s19
      %p26 = scmp.eq.s32.totalorder %s14, 1
      %p27 = por %p25, %p26
      %p28 = scmp.ne.s32.totalorder %s19, %s20
      %p29 = scmp.eq.s32.totalorder %s14, 0
      %p30 = por %p28, %p29
      %p31 = scmp.ne.s32.totalorder %s19, %s20
      %p32 = scmp.eq.s32.totalorder %s15, 1
      %p33 = por %p31, %p32
      %p35 = scmp.ne.s32.totalorder %s20, %s34
      %p36 = scmp.eq.s32.totalorder %s15, 0
      %p37 = por %p35, %p36
      %s38 = ssub.s32 %s9, %s16
      %p39 = scmp.eq.s32.totalorder %s38, 0
      %s41 = sadd.s32 %s40, 1
      %s42 = scalar_select %p39, %s40, %s41
      %p45 = pneg %p39
      %p46 = scmp.eq.s32.totalorder %s9, 1
      %p47 = por %p45, %p46
      %p48 = scmp.ne.s32.totalorder %s40, %s43
      %p49 = scmp.eq.s32.totalorder %s9, 0
      %p50 = por %p48, %p49
      %p51 = scmp.ne.s32.totalorder %s40, %s43
      %p52 = scmp.eq.s32.totalorder %s14, 1
      %p53 = por %p51, %p52
      %p54 = scmp.ne.s32.totalorder %s43, %s44
      %p55 = scmp.eq.s32.totalorder %s14, 0
      %p56 = por %p54, %p55
      %p57 = scmp.ne.s32.totalorder %s43, %s44
      %p58 = scmp.eq.s32.totalorder %s15, 1
      %p59 = por %p57, %p58
      %p61 = scmp.ne.s32.totalorder %s44, %s60
      %p62 = scmp.eq.s32.totalorder %s15, 0
      %p63 = por %p61, %p62
      %s64 = ssub.s32 %s9, %s16
      %p65 = scmp.eq.s32.totalorder %s64, 0
      %s67 = sadd.s32 %s66, 1
      %s68 = scalar_select %p65, %s66, %s67
      %p71 = pneg %p65
      %p72 = scmp.eq.s32.totalorder %s9, 1
      %p73 = por %p71, %p72
      %p74 = scmp.ne.s32.totalorder %s66, %s69
      %p75 = scmp.eq.s32.totalorder %s9, 0
      %p76 = por %p74, %p75
      %p77 = scmp.ne.s32.totalorder %s66, %s69
      %p78 = scmp.eq.s32.totalorder %s14, 1
      %p79 = por %p77, %p78
      %p80 = scmp.ne.s32.totalorder %s69, %s70
      %p81 = scmp.eq.s32.totalorder %s14, 0
      %p82 = por %p80, %p81
      %p83 = scmp.ne.s32.totalorder %s69, %s70
      %p84 = scmp.eq.s32.totalorder %s15, 1
      %p85 = por %p83, %p84
      %p87 = scmp.ne.s32.totalorder %s70, %s86
      %p88 = scmp.eq.s32.totalorder %s15, 0
      %p89 = por %p87, %p88
      %p90 = scmp.le.s32.totalorder 1, %s9
      %p91 = scmp.lt.s32.totalorder %s9, 3
      %p92 = pnand %p90, %p91
      %p93 = pneg %p92
      // Predicated region
      $region9: #{barycenter_forward.1} parent=5 // pred_check
        _
      $region10: #{barycenter_forward.1} parent=5 // pred_check_branch
        %95 = sbr.rel (%p92) target = $region12
      $region11: #{barycenter_forward.1} parent=5 // pred_region
        %s96 = ssub.s32 %s9, 1
        // Predicated region
        $region13: #{barycenter_forward.1} parent=11 // pred_check
          %p97 = pneg %p30
        $region14: #{barycenter_forward.1} parent=11 // pred_check_branch
          %99 = sbr.rel (%p97) target = $region16
        $region15: #{barycenter_forward.1} parent=11 // pred_region
          %s101 = ssub.s32 16, 16
          %102 = vsyncadd [#allocation3], %s101
          %s104 = sshll.u32 %s0, 4
          %s105 = int_to_ptr.vmem [resolvable:$true] %s104
          %107 = dma.vmem_to_smem %s105, 16, [#allocation2], [#allocation3]
        $region16: #{barycenter_forward.1} parent=11 // pred_fallthru
          _
      $region12: #{barycenter_forward.1} parent=5 // pred_fallthru
        _
      %p108 = scmp.lt.s32.totalorder %s9, 2
      // Predicated region
      $region17: #{barycenter_forward.1} parent=5 // pred_check
        %p109 = pneg %p108
      $region18: #{barycenter_forward.1} parent=5 // pred_check_branch
        %111 = sbr.rel (%p109) target = $region20
      $region19: #{barycenter_forward.1} parent=5 // pred_region
        // Predicated region
        $region21: #{barycenter_forward.1} parent=19 // pred_check
          %p112 = pneg %p50
        $region22: #{barycenter_forward.1} parent=19 // pred_check_branch
          %114 = sbr.rel (%p112) target = $region24
        $region23: #{barycenter_forward.1} parent=19 // pred_region
          %p115 = scmp.lt.s32.totalorder %s9, 1
          %s116 = scalar_select %p115, %s9, 1
          %s117 = smul.addr %s116, 6
          %s118 = scalar_lea.vmem %s1, %s117
        $region24: #{barycenter_forward.1} parent=19 // pred_fallthru
          _
      $region20: #{barycenter_forward.1} parent=5 // pred_fallthru
        _
      %p119 = scmp.le.s32.totalorder 1, %s9
      %p120 = scmp.lt.s32.totalorder %s9, 3
      %p121 = pnand %p119, %p120
      %p122 = pneg %p121
      // Predicated region
      $region25: #{barycenter_forward.1} parent=5 // pred_check
        _
      $region26: #{barycenter_forward.1} parent=5 // pred_check_branch
        %124 = sbr.rel (%p121) target = $region28
      $region27: #{barycenter_forward.1} parent=5 // pred_region
        %s125 = ssub.s32 %s9, 1
        // Predicated region
        $region29: #{barycenter_forward.1} parent=27 // pred_check
          %p126 = pneg %p30
        $region30: #{barycenter_forward.1} parent=27 // pred_check_branch
          %128 = sbr.rel (%p126) target = $region32
        $region31: #{barycenter_forward.1} parent=27 // pred_region
          %129 = dma.done [#allocation3], 16
        $region32: #{barycenter_forward.1} parent=27 // pred_fallthru
          _
        %130 = sfence
        %p131 = pneg %p30
        %p132 = pneg %p27
        %p133 = scmp.lt.s32.totalorder %s14, 1
        %s134 = scalar_select %p133, %s14, 1
        %s135 = smul.addr %s134, 6
        %s136 = scalar_lea.vmem %s1, %s135
        %p137 = pneg %p56
        %p138 = pneg %p53
        %p139 = pneg %p82
        %p140 = pneg %p79
        %p141 = scmp.lt.s32.totalorder %s14, 1
        %s142 = scalar_select %p141, %s14, 1
        %s143 = smul.addr %s142, 6
        %s144 = scalar_lea.vmem %s2, %s143
        %p145 = scmp.lt.s32.totalorder %s14, 1
        %s146 = scalar_select %p145, %s14, 1
        %s147 = smul.addr %s146, 6
        %s148 = scalar_lea.vmem %s1, %s147
        %p149 = scmp.lt.s32.totalorder %s14, 1
        %s150 = scalar_select %p149, %s14, 1
        %s151 = smul.addr %s150, 6
        %s152 = scalar_lea.vmem %s2, %s151
        %v153 = vld [vmem:[%s148] sm:$0x3f]
        %v154 = vlaneseq
        %v155 = vand.u32 %v154, 127
        %v156 = vadd.s32 %v155, 128
        %v157 = vadd.s32 %v155, 256
        %v158 = vadd.s32 %v155, 384
        %v159 = vadd.s32 %v155, 512
        %v160 = vadd.s32 %v155, 640
        %vm161 = vcmp.lt.s32.totalorder %v155, 0
        %v162 = vsub.s32 0, %v155
        %v163 = vsel %vm161, %v162, %v155
        %v164 = vmul.u32.u64.compose %v163, 2863311531
        %v165 = vextract.low.u32 %v164
        %v166 = vextract.high.u32 %v164
        %v167 = vshrl.u32 %v166, 1
        %v168 = vmul.u32 %v167, 3
        %v169 = vsub.s32 %v163, %v168
        %v170 = vsub.s32 0, %v169
        %v171 = vsel %vm161, %v170, %v169
        %vm172 = vcmp.lt.s32.totalorder %v156, 0
        %v173 = vsub.s32 0, %v156
        %v174 = vsel %vm172, %v173, %v156
        %v175 = vmul.u32.u64.compose %v174, 2863311531
        %v176 = vextract.low.u32 %v175
        %v177 = vextract.high.u32 %v175
        %v178 = vshrl.u32 %v177, 1
        %v179 = vmul.u32 %v178, 3
        %v180 = vsub.s32 %v174, %v179
        %v181 = vsub.s32 0, %v180
        %v182 = vsel %vm172, %v181, %v180
        %vm183 = vcmp.lt.s32.totalorder %v157, 0
        %v184 = vsub.s32 0, %v157
        %v185 = vsel %vm183, %v184, %v157
        %v186 = vmul.u32.u64.compose %v185, 2863311531
        %v187 = vextract.low.u32 %v186
        %v188 = vextract.high.u32 %v186
        %v189 = vshrl.u32 %v188, 1
        %v190 = vmul.u32 %v189, 3
        %v191 = vsub.s32 %v185, %v190
        %v192 = vsub.s32 0, %v191
        %v193 = vsel %vm183, %v192, %v191
        %vm194 = vcmp.lt.s32.totalorder %v158, 0
        %v195 = vsub.s32 0, %v158
        %v196 = vsel %vm194, %v195, %v158
        %v197 = vmul.u32.u64.compose %v196, 2863311531
        %v198 = vextract.low.u32 %v197
        %v199 = vextract.high.u32 %v197
        %v200 = vshrl.u32 %v199, 1
        %v201 = vmul.u32 %v200, 3
        %v202 = vsub.s32 %v196, %v201
        %v203 = vsub.s32 0, %v202
        %v204 = vsel %vm194, %v203, %v202
        %vm205 = vcmp.lt.s32.totalorder %v159, 0
        %v206 = vsub.s32 0, %v159
        %v207 = vsel %vm205, %v206, %v159
        %v208 = vmul.u32.u64.compose %v207, 2863311531
        %v209 = vextract.low.u32 %v208
        %v210 = vextract.high.u32 %v208
        %v211 = vshrl.u32 %v210, 1
        %v212 = vmul.u32 %v211, 3
        %v213 = vsub.s32 %v207, %v212
        %v214 = vsub.s32 0, %v213
        %v215 = vsel %vm205, %v214, %v213
        %vm216 = vcmp.lt.s32.totalorder %v160, 0
        %v217 = vsub.s32 0, %v160
        %v218 = vsel %vm216, %v217, %v160
        %v219 = vmul.u32.u64.compose %v218, 2863311531
        %v220 = vextract.low.u32 %v219
        %v221 = vextract.high.u32 %v219
        %v222 = vshrl.u32 %v221, 1
        %v223 = vmul.u32 %v222, 3
        %v224 = vsub.s32 %v218, %v223
        %v225 = vsub.s32 0, %v224
        %v226 = vsel %vm216, %v225, %v224
        %vm227 = vcmp.ne.s32.totalorder %v171, 0
        %vm228 = vcmp.ne.s32.totalorder %v182, 0
        %vm229 = vcmp.ne.s32.totalorder %v193, 0
        %vm230 = vcmp.ne.s32.totalorder %v204, 0
        %vm231 = vcmp.ne.s32.totalorder %v215, 0
        %vm232 = vcmp.ne.s32.totalorder %v226, 0
        %vm233 = vcmp.lt.s32.totalorder %v171, 0
        %vm234 = vcmp.lt.s32.totalorder %v182, 0
        %vm235 = vcmp.lt.s32.totalorder %v193, 0
        %vm236 = vcmp.lt.s32.totalorder %v204, 0
        %vm237 = vcmp.lt.s32.totalorder %v215, 0
        %vm238 = vcmp.lt.s32.totalorder %v226, 0
        %vm239 = vmand %vm233, %vm227
        %vm240 = vmand %vm234, %vm228
        %vm241 = vmand %vm235, %vm229
        %vm242 = vmand %vm236, %vm230
        %vm243 = vmand %vm237, %vm231
        %vm244 = vmand %vm238, %vm232
        %v245 = vadd.s32 %v171, 3
        %v246 = vadd.s32 %v182, 3
        %v247 = vadd.s32 %v193, 3
        %v248 = vadd.s32 %v204, 3
        %v249 = vadd.s32 %v215, 3
        %v250 = vadd.s32 %v226, 3
        %v251 = vsel %vm239, %v245, %v171
        %v252 = vsel %vm240, %v246, %v182
        %v253 = vsel %vm241, %v247, %v193
        %v254 = vsel %vm242, %v248, %v204
        %v255 = vsel %vm243, %v249, %v215
        %v256 = vsel %vm244, %v250, %v226
        %v257 = vadd.f32 %v153, 0.0
        %vm258 = vcmp.eq.s32.totalorder %v251, 0
        %vm259 = vcmp.eq.s32.totalorder %v252, 0
        %vm260 = vcmp.eq.s32.totalorder %v253, 0
        %vm261 = vcmp.eq.s32.totalorder %v254, 0
        %vm262 = vcmp.eq.s32.totalorder %v255, 0
        %vm263 = vcmp.eq.s32.totalorder %v256, 0
        %v265 = vlaneseq
        %v266 = vshrl.u32 %v265, 7
        %v267 = vsub.s32 0, %v266
        %v268 = vrot.slane %v257, %v267
        %v269 = vlaneseq
        %v270 = vshrl.u32 %v269, 7
        %v271 = vsub.s32 1, %v270
        %v272 = vrot.slane %v257, %v271
        %v273 = vlaneseq
        %v274 = vshrl.u32 %v273, 7
        %v275 = vsub.s32 2, %v274
        %v276 = vrot.slane %v257, %v275
        %v277 = vlaneseq
        %v278 = vshrl.u32 %v277, 7
        %v279 = vsub.s32 3, %v278
        %v280 = vrot.slane %v257, %v279
        %v281 = vlaneseq
        %v282 = vshrl.u32 %v281, 7
        %v283 = vsub.s32 4, %v282
        %v284 = vrot.slane %v257, %v283
        %v285 = vlaneseq
        %v286 = vshrl.u32 %v285, 7
        %v287 = vsub.s32 5, %v286
        %v288 = vrot.slane %v257, %v287
        %v295 = vsel %vm258, %v268, 0.0
        %v296 = vsel %vm259, %v272, 0.0
        %v297 = vsel %vm260, %v276, 0.0
        %v298 = vsel %vm261, %v280, 0.0
        %v299 = vsel %vm262, %v284, 0.0
        %v300 = vsel %vm263, %v288, 0.0
        %vm301 = vcmask 1040384
        %v302 = vsel %vm301, %v295, 0.0
        %v303 = vsel %vm301, %v296, 0.0
        %v304 = vadd.f32 %v302, %v303
        %v305 = vsel %vm301, %v297, 0.0
        %v306 = vadd.f32 %v304, %v305
        %v307 = vsel %vm301, %v298, 0.0
        %v308 = vadd.f32 %v306, %v307
        %v309 = vsel %vm301, %v299, 0.0
        %v310 = vadd.f32 %v308, %v309
        %v311 = vsel %vm301, %v300, 0.0
        %v312 = vadd.f32 %v310, %v311
        %313 = vadd.xlane.f32.xlu0 %v312
        %v314 = vpop.xlane.xlu0 %313
        %v315 = vrot.slane %v314, 4
        %v316 = vadd.f32 %v314, %v315
        %v317 = vrot.slane %v316, 2
        %v318 = vadd.f32 %v316, %v317
        %v319 = vrot.slane %v318, 1
        %v320 = vadd.f32 %v318, %v319
        %s321 = vtos %v320
        %v322 = vstv %s321
        %v323 = vmul.f32 %v322, 0.00390625
        %vm324 = vcmp.eq.s32.totalorder %v251, 1
        %vm325 = vcmp.eq.s32.totalorder %v252, 1
        %vm326 = vcmp.eq.s32.totalorder %v253, 1
        %vm327 = vcmp.eq.s32.totalorder %v254, 1
        %vm328 = vcmp.eq.s32.totalorder %v255, 1
        %vm329 = vcmp.eq.s32.totalorder %v256, 1
        %v330 = vsel %vm324, %v268, 0.0
        %v331 = vsel %vm325, %v272, 0.0
        %v332 = vsel %vm326, %v276, 0.0
        %v333 = vsel %vm327, %v280, 0.0
        %v334 = vsel %vm328, %v284, 0.0
        %v335 = vsel %vm329, %v288, 0.0
        %v336 = vsel %vm301, %v330, 0.0
        %v337 = vsel %vm301, %v331, 0.0
        %v338 = vadd.f32 %v336, %v337
        %v339 = vsel %vm301, %v332, 0.0
        %v340 = vadd.f32 %v338, %v339
        %v341 = vsel %vm301, %v333, 0.0
        %v342 = vadd.f32 %v340, %v341
        %v343 = vsel %vm301, %v334, 0.0
        %v344 = vadd.f32 %v342, %v343
        %v345 = vsel %vm301, %v335, 0.0
        %v346 = vadd.f32 %v344, %v345
        %347 = vadd.xlane.f32.xlu0 %v346
        %v348 = vpop.xlane.xlu0 %347
        %v349 = vrot.slane %v348, 4
        %v350 = vadd.f32 %v348, %v349
        %v351 = vrot.slane %v350, 2
        %v352 = vadd.f32 %v350, %v351
        %v353 = vrot.slane %v352, 1
        %v354 = vadd.f32 %v352, %v353
        %s355 = vtos %v354
        %v356 = vstv %s355
        %v357 = vmul.f32 %v356, 0.00390625
        %vm358 = vcmp.eq.s32.totalorder %v251, 2
        %vm359 = vcmp.eq.s32.totalorder %v252, 2
        %vm360 = vcmp.eq.s32.totalorder %v253, 2
        %vm361 = vcmp.eq.s32.totalorder %v254, 2
        %vm362 = vcmp.eq.s32.totalorder %v255, 2
        %vm363 = vcmp.eq.s32.totalorder %v256, 2
        %v364 = vsel %vm358, %v268, 0.0
        %v365 = vsel %vm359, %v272, 0.0
        %v366 = vsel %vm360, %v276, 0.0
        %v367 = vsel %vm361, %v280, 0.0
        %v368 = vsel %vm362, %v284, 0.0
        %v369 = vsel %vm363, %v288, 0.0
        %v370 = vsel %vm301, %v364, 0.0
        %v371 = vsel %vm301, %v365, 0.0
        %v372 = vadd.f32 %v370, %v371
        %v373 = vsel %vm301, %v366, 0.0
        %v374 = vadd.f32 %v372, %v373
        %v375 = vsel %vm301, %v367, 0.0
        %v376 = vadd.f32 %v374, %v375
        %v377 = vsel %vm301, %v368, 0.0
        %v378 = vadd.f32 %v376, %v377
        %v379 = vsel %vm301, %v369, 0.0
        %v380 = vadd.f32 %v378, %v379
        %381 = vadd.xlane.f32.xlu0 %v380
        %v382 = vpop.xlane.xlu0 %381
        %v383 = vrot.slane %v382, 4
        %v384 = vadd.f32 %v382, %v383
        %v385 = vrot.slane %v384, 2
        %v386 = vadd.f32 %v384, %v385
        %v387 = vrot.slane %v386, 1
        %v388 = vadd.f32 %v386, %v387
        %s389 = vtos %v388
        %v390 = vstv %s389
        %v391 = vmul.f32 %v390, 0.00390625
        %s392 = sld [smem:[#allocation2]]
        %v393 = vstv %s392
        %v394 = vsub.f32 %v393, %v323
        %s395 = sld [smem:[#allocation2 + $0x1]]
        %v396 = vstv %s395
        %v397 = vsub.f32 %v396, %v357
        %s398 = sld [smem:[#allocation2 + $0x2]]
        %v399 = vstv %s398
        %v400 = vsub.f32 %v399, %v391
        %v401 = vsel %vm324, %v397, %v400
        %v402 = vsel %vm325, %v397, %v400
        %v403 = vsel %vm326, %v397, %v400
        %v404 = vsel %vm327, %v397, %v400
        %v405 = vsel %vm328, %v397, %v400
        %v406 = vsel %vm329, %v397, %v400
        %v407 = vsel %vm258, %v394, %v401
        %v408 = vsel %vm259, %v394, %v402
        %v409 = vsel %vm260, %v394, %v403
        %v410 = vsel %vm261, %v394, %v404
        %v411 = vsel %vm262, %v394, %v405
        %v412 = vsel %vm263, %v394, %v406
        %v419 = vcombine.low %v407, %v408
        %v420 = vcombine.low %v409, %v410
        %v421 = vcombine.low %v411, %v412
        %v423 = vunpack.c.l.s4 1966171168
        %v424 = vunpack.c.0.s8 %v423
        %v425 = vlaneseq
        %v426 = vshrl.u32 %v425, 7
        %v427 = vsub.s32 %v424, %v426
        %v428 = vrot.slane %v419, %v427
        %v430 = vunpack.c.l.s4 1966171168
        %v431 = vunpack.c.0.s8 %v430
        %v432 = vlaneseq
        %v433 = vshrl.u32 %v432, 7
        %v434 = vsub.s32 %v431, %v433
        %v435 = vrot.slane %v420, %v434
        %v437 = vunpack.c.l.s4 1966171168
        %v438 = vunpack.c.0.s8 %v437
        %v439 = vlaneseq
        %v440 = vshrl.u32 %v439, 7
        %v441 = vsub.s32 %v438, %v440
        %v442 = vrot.slane %v421, %v441
        %v443 = vcombine.low %v428, %v435
        %v445 = vunpack.c.l.s4 1966171168
        %v446 = vunpack.c.0.s8 %v445
        %v447 = vlaneseq
        %v448 = vshrl.u32 %v447, 7
        %v449 = vsub.s32 %v446, %v448
        %v450 = vrot.slane %v443, %v449
        %v452 = vunpack.c.l.s4 1966171168
        %v453 = vunpack.c.0.s8 %v452
        %v454 = vlaneseq
        %v455 = vshrl.u32 %v454, 7
        %v456 = vsub.s32 %v453, %v455
        %v457 = vrot.slane %v442, %v456
        %v458 = vcombine.low %v450, %v457
        %v460 = vadd.f32 %v153, %v458
        %v461 = vlaneseq
        %vm462 = vcmp.ge.s32.totalorder %v461, 0
        %vm463 = vcmp.lt.s32.totalorder %v461, 768
        %vm464 = vmand %vm462, %vm463
        %465 = vst.msk [vmem:[%s152] sm:$0x3f] %vm464, %v460
        %p466 = scmp.lt.s32.totalorder %s14, 1
        %s467 = scalar_select %p466, %s14, 1
        %s468 = smul.addr %s467, 6
        %s469 = scalar_lea.vmem %s2, %s468
        // Predicated region
        $region33: #{barycenter_forward.1} parent=27 // pred_check
          %p470 = pneg %p79
        $region34: #{barycenter_forward.1} parent=27 // pred_check_branch
          %472 = sbr.rel (%p470) target = $region36
        $region35: #{barycenter_forward.1} parent=27 // pred_region
          _
        $region36: #{barycenter_forward.1} parent=27 // pred_fallthru
          _
      $region28: #{barycenter_forward.1} parent=5 // pred_fallthru
        _
      %p473 = scmp.le.s32.totalorder 2, %s9
      // Predicated region
      $region37: #{barycenter_forward.1} parent=5 // pred_check
        %p474 = pneg %p473
      $region38: #{barycenter_forward.1} parent=5 // pred_check_branch
        %476 = sbr.rel (%p474) target = $region40
      $region39: #{barycenter_forward.1} parent=5 // pred_region
        %s477 = ssub.s32 %s9, 2
        // Predicated region
        $region41: #{barycenter_forward.1} parent=39 // pred_check
          %p478 = pneg %p85
        $region42: #{barycenter_forward.1} parent=39 // pred_check_branch
          %480 = sbr.rel (%p478) target = $region44
        $region43: #{barycenter_forward.1} parent=39 // pred_region
          %p481 = scmp.lt.s32.totalorder %s15, 1
          %s482 = scalar_select %p481, %s15, 1
          %s483 = smul.addr %s482, 6
          %s484 = scalar_lea.vmem %s2, %s483
        $region44: #{barycenter_forward.1} parent=39 // pred_fallthru
          _
      $region40: #{barycenter_forward.1} parent=5 // pred_fallthru
        _
    $region6: #{barycenter_forward.1} parent=1 // loop_footer
      %s13 = sadd.s32 1, %s9
    $region7: #{barycenter_forward.1} parent=1 // loop_footer_branch
      %8 = sbr.rel target = $region3
    $region8: #{barycenter_forward.1} parent=1 // loop_exit
      _
    %485 = vsyncpa [#allocation3], 1
    %s486 = scalar_lea.sflag [#allocation3], 1
    %487 = vsyncpa %s486, 1

</llo_original>
